<compile_context>
chip_gen: v7x
topology: tpu7x:2x2x1
jax: 0.10.0
libtpu: 0.0.40
codegen_flags: <defaults>
</compile_context>

<pallas_src>
import jax
import jax.numpy as jnp
from jax import lax
from jax.experimental import pallas as pl
from jax.experimental.pallas import tpu as pltpu

F_IN = 10
F_HID = 32
TB = 8192  # batch-tile width (lanes); multiple of 128


def _round_up(v, m):
    return ((v + m - 1) // m) * m


def mlp_kernel(x_ref, w1_ref, b1_ref, w2_ref, b2_ref, o_ref):
    # x_ref : (tb, 10)   natural-layout batch block (no wrapper transpose)
    # w1_ref: (32, 10)   b1_ref: (32, 1)   w2_ref: (32, 1)
    # b2_ref: (1,) SMEM  o_ref : (1, tb)
    #
    # First linear on the MXU.  Contract the feature dims of w1 (dim 1) and
    # x (dim 1) directly -> result lands batch-on-lanes as (32, tb), which
    # folds the x transpose into the matmul.
    z = lax.dot_general(
        w1_ref[...], x_ref[...],
        dimension_numbers=(((1,), (1,)), ((), ())),
        preferred_element_type=jnp.float32,
    )
    z = z + b1_ref[...]                       # lane-broadcast bias add (VPU)
    # Sigmoid via tanh: sigmoid(z) = 0.5 * (tanh(z/2) + 1)  -> single EUP op.
    h = 0.5 * jnp.tanh(0.5 * z) + 0.5
    # Second linear (32 -> 1): VPU multiply + cross-sublane (XLU) reduce.
    # An MXU matmul with an output dim of 1 would waste the systolic array.
    out = jnp.sum(h * w2_ref[...], axis=0, keepdims=True) + b2_ref[0]
    o_ref[...] = out.astype(o_ref.dtype)


def mlp_forward(x, w1, b1, w2, b2, *, tb=TB):
    """x: (B, 10) float32.  Weights in PyTorch convention:
    w1 (32, 10), b1 (32,), w2 (1, 32), b2 (1,).  Returns (B, 1)."""
    B, f_in = x.shape
    f_hid = w1.shape[0]

    b128 = _round_up(B, 128)           # batch rounded up to full lanes
    tb_eff = min(tb, b128)
    # v7x has 2 TensorCores: when the batch is big enough, make sure there are
    # at least two independent batch tiles so dimension_semantics="parallel"
    # can shard them across both cores.
    if b128 >= 1024 and b128 // tb_eff < 2:
        tb_eff = _round_up(b128 // 2, 128)
    n_tiles = pl.cdiv(b128, tb_eff)
    b_pad = n_tiles * tb_eff

    # Pure pad along batch (no transpose, no extra HBM pass over x under jit).
    x_pad = jnp.pad(x, ((0, b_pad - B), (0, 0)))
    b1_col = b1.reshape(f_hid, 1)      # (32, 1)
    w2_col = w2.reshape(f_hid, 1)      # (32, 1)

    out_t = pl.pallas_call(
        mlp_kernel,
        out_shape=jax.ShapeDtypeStruct((1, b_pad), jnp.float32),
        grid_spec=pl.GridSpec(
            grid=(n_tiles,),
            in_specs=[
                pl.BlockSpec((tb_eff, f_in), lambda i: (i, 0)),      # x tile
                pl.BlockSpec((f_hid, f_in), lambda i: (0, 0)),       # w1 (resident)
                pl.BlockSpec((f_hid, 1), lambda i: (0, 0)),          # b1 (resident)
                pl.BlockSpec((f_hid, 1), lambda i: (0, 0)),          # w2 (resident)
                pl.BlockSpec(memory_space=pltpu.MemorySpace.SMEM),   # b2 scalar
            ],
            out_specs=pl.BlockSpec((1, tb_eff), lambda i: (0, i)),
        ),
        compiler_params=pltpu.CompilerParams(
            # batch tiles are independent -> shard across TCs on v7x
            dimension_semantics=("parallel",),
            vmem_limit_bytes=32 * 1024 * 1024,
        ),
    )(x_pad, w1, b1_col, w2_col, b2)

    return out_t[:, :B].T  # (B, 1)


def init_params(key):
    # Deterministic init mimicking PyTorch nn.Linear default:
    # U(-1/sqrt(fan_in), 1/sqrt(fan_in)) for weight and bias.
    k1, k2, k3, k4 = jax.random.split(key, 4)
    bound1 = 1.0 / jnp.sqrt(jnp.float32(F_IN))
    bound2 = 1.0 / jnp.sqrt(jnp.float32(F_HID))
    w1 = jax.random.uniform(k1, (F_HID, F_IN), jnp.float32, -bound1, bound1)
    b1 = jax.random.uniform(k2, (F_HID,), jnp.float32, -bound1, bound1)
    w2 = jax.random.uniform(k3, (1, F_HID), jnp.float32, -bound2, bound2)
    b2 = jax.random.uniform(k4, (1,), jnp.float32, -bound2, bound2)
    return w1, b1, w2, b2


if __name__ == "__main__":
    key = jax.random.PRNGKey(0)
    kx, kp = jax.random.split(key)

    B = 8  # small demo batch (kernel pays off at large B; correctness check here)
    x = jax.random.normal(kx, (B, F_IN), jnp.float32)
    w1, b1, w2, b2 = init_params(kp)

    fwd = jax.jit(mlp_forward)  # fuse pad / slice / transpose around the kernel
    out = fwd(x, w1, b1, w2, b2)
    out = jax.block_until_ready(out)

    # Pure-JAX reference (PyTorch convention: y = x @ W.T + b)
    ref = jax.nn.sigmoid(x @ w1.T + b1) @ w2.T + b2
    assert out.shape == (B, 1)
    assert jnp.allclose(out, ref, atol=1e-5, rtol=1e-5)

    print("KERNEL_OK")
</pallas_src>

<mosaic_0001>
module attributes {stable_mosaic.version = 11 : i64} {
  func.func @mlp_kernel(%arg0: i32, %arg1: memref<128x10xf32, #tpu.memory_space<vmem>>, %arg2: memref<32x10xf32, #tpu.memory_space<vmem>>, %arg3: memref<32x1xf32, #tpu.memory_space<vmem>>, %arg4: memref<32x1xf32, #tpu.memory_space<vmem>>, %arg5: memref<1xf32, #tpu.memory_space<smem>>, %arg6: memref<1x128xf32, #tpu.memory_space<vmem>>) attributes {dimension_semantics = [#tpu.dimension_semantics<parallel>], iteration_bounds = array<i64: 1>, scalar_prefetch = 0 : i64, scratch_operands = 0 : i64, tpu.core_type = #tpu.core_type<tc>, window_params = [{transform_indices = @transform_0, window_bounds = array<i64: 128, 10>}, {pipeline_mode = #tpu.pipeline_mode<synchronous>, transform_indices = @transform_1, window_bounds = array<i64: 32, 10>}, {pipeline_mode = #tpu.pipeline_mode<synchronous>, transform_indices = @transform_2, window_bounds = array<i64: 32, 1>}, {pipeline_mode = #tpu.pipeline_mode<synchronous>, transform_indices = @transform_3, window_bounds = array<i64: 32, 1>}, {transform_indices = @transform_4, window_bounds = array<i64: 1>}, {transform_indices = @transform_5, window_bounds = array<i64: 1, 128>}]} {
    %c0 = arith.constant 0 : index
    %c0_0 = arith.constant 0 : index
    %0 = vector.load %arg2[%c0, %c0_0] : memref<32x10xf32, #tpu.memory_space<vmem>>, vector<32x10xf32>
    %c0_1 = arith.constant 0 : index
    %c0_2 = arith.constant 0 : index
    %1 = vector.load %arg1[%c0_1, %c0_2] : memref<128x10xf32, #tpu.memory_space<vmem>>, vector<128x10xf32>
    %cst = arith.constant dense<0.000000e+00> : vector<32x128xf32>
    %2 = tpu.matmul %0, %1, %cst {dimension_numbers = #tpu.dot_dimension_numbers<[1], [1], [0], [0], [0, 0, 1, 0], [], []>} : vector<32x10xf32>, vector<128x10xf32>, vector<32x128xf32> -> vector<32x128xf32>
    %c0_3 = arith.constant 0 : index
    %c0_4 = arith.constant 0 : index
    %3 = vector.load %arg3[%c0_3, %c0_4] : memref<32x1xf32, #tpu.memory_space<vmem>>, vector<32x1xf32>
    %4 = vector.broadcast %3 : vector<32x1xf32> to vector<32x128xf32>
    %5 = arith.addf %2, %4 : vector<32x128xf32>
    %cst_5 = arith.constant 5.000000e-01 : f32
    %6 = vector.broadcast %cst_5 : f32 to vector<32x128xf32>
    %7 = arith.mulf %6, %5 : vector<32x128xf32>
    %8 = math.tanh %7 : vector<32x128xf32>
    %cst_6 = arith.constant 5.000000e-01 : f32
    %9 = vector.broadcast %cst_6 : f32 to vector<32x128xf32>
    %10 = arith.mulf %9, %8 : vector<32x128xf32>
    %cst_7 = arith.constant 5.000000e-01 : f32
    %11 = vector.broadcast %cst_7 : f32 to vector<32x128xf32>
    %12 = arith.addf %10, %11 : vector<32x128xf32>
    %c0_8 = arith.constant 0 : index
    %c0_9 = arith.constant 0 : index
    %13 = vector.load %arg4[%c0_8, %c0_9] : memref<32x1xf32, #tpu.memory_space<vmem>>, vector<32x1xf32>
    %14 = vector.broadcast %13 : vector<32x1xf32> to vector<32x128xf32>
    %15 = arith.mulf %12, %14 : vector<32x128xf32>
    %cst_10 = arith.constant dense<0.000000e+00> : vector<128xf32>
    %16 = vector.multi_reduction <add>, %15, %cst_10 [0] : vector<32x128xf32> to vector<128xf32>
    %17 = vector.shape_cast %16 : vector<128xf32> to vector<1x128xf32>
    %c0_11 = arith.constant 0 : index
    %18 = memref.load %arg5[%c0_11] : memref<1xf32, #tpu.memory_space<smem>>
    %19 = vector.broadcast %18 : f32 to vector<1x128xf32>
    %20 = arith.addf %17, %19 : vector<1x128xf32>
    %c0_12 = arith.constant 0 : index
    %c0_13 = arith.constant 0 : index
    %21 = vector.load %arg6[%c0_12, %c0_13] : memref<1x128xf32, #tpu.memory_space<vmem>>, vector<1x128xf32>
    tpu.vector_store %arg6[%c0_12, %c0_13], %20 {strides = array<i32>} : memref<1x128xf32, #tpu.memory_space<vmem>>, vector<1x128xf32>,
    return
  }
  func.func @transform_0(%arg0: i32) -> (i32, i32) {
    %c0_i32 = arith.constant 0 : i32
    %c0_i32_0 = arith.constant 0 : i32
    return %arg0, %c0_i32 : i32, i32
  }
  func.func @transform_1(%arg0: i32) -> (i32, i32) {
    %c0_i32 = arith.constant 0 : i32
    %c0_i32_0 = arith.constant 0 : i32
    %c0_i32_1 = arith.constant 0 : i32
    return %c0_i32, %c0_i32_0 : i32, i32
  }
  func.func @transform_2(%arg0: i32) -> (i32, i32) {
    %c0_i32 = arith.constant 0 : i32
    %c0_i32_0 = arith.constant 0 : i32
    %c0_i32_1 = arith.constant 0 : i32
    return %c0_i32, %c0_i32_0 : i32, i32
  }
  func.func @transform_3(%arg0: i32) -> (i32, i32) {
    %c0_i32 = arith.constant 0 : i32
    %c0_i32_0 = arith.constant 0 : i32
    %c0_i32_1 = arith.constant 0 : i32
    return %c0_i32, %c0_i32_0 : i32, i32
  }
  func.func @transform_4(%arg0: i32) -> i32 {
    %c0_i32 = arith.constant 0 : i32
    %c0_i32_0 = arith.constant 0 : i32
    return %c0_i32 : i32
  }
  func.func @transform_5(%arg0: i32) -> (i32, i32) {
    %c0_i32 = arith.constant 0 : i32
    %c0_i32_0 = arith.constant 0 : i32
    return %c0_i32, %arg0 : i32, i32
  }
}

</mosaic_0001>

<llo_original>
// kernel: mlp_forward.1
$region0: #{mlp_forward.1}
  #allocation0 [shape = 'u32[]', space=smem, size = 0x4, offset = 0x4, fixed_abs, tag = 'smem constant byte address 0x4 - core index']
  #allocation1 [shape = 'u32[144,128]{1,0:T(1,128)}', space=vmem, size = 0x12000, scoped, tag = 'internal scratch']
  #allocation2 [shape = 'f32[1]{0:T(128)S(6)}', space=smem, size = 0x200, scoped, tag = 'scoped memory for mlp_forward.1']
  %s0 = inlined_call_operand.vmem [shape: f32[128,10], index: 0, kind: input, shape index: {}]
  %s1 = inlined_call_operand.vmem [shape: f32[32,10], index: 1, kind: input, shape index: {}]
  %s2 = inlined_call_operand.vmem [shape: f32[32,1], index: 2, kind: input, shape index: {}]
  %s3 = inlined_call_operand.vmem [shape: f32[32,1], index: 3, kind: input, shape index: {}]
  %s4 = inlined_call_operand.<no memory space> [shape: f32[1], index: 4, kind: input, shape index: {}]
  %s5 = inlined_call_operand.vmem [shape: f32[1,128], index: 5, kind: output, shape index: {}]
  %s6 = sld [smem:[#allocation0]]
  $region30: #{mlp_forward.1} parent=0
    _
  %s8 = ssub.s32 1, %s6
  %s9 = scalar_select 0, %s8, %s6
  %10 = sst [smem:[#allocation2]] %s4
  // Predicated region
  $region2: #{mlp_forward.1} parent=0 // pred_check
    _
  $region3: #{mlp_forward.1} parent=0 // pred_check_branch
    %12 = sbr.rel (0) target = $region5
  $region4: #{mlp_forward.1} parent=0 // pred_region
    _
  $region5: #{mlp_forward.1} parent=0 // pred_fallthru
    _
  // Predicated region
  $region6: #{mlp_forward.1} parent=0 // pred_check
    _
  $region7: #{mlp_forward.1} parent=0 // pred_check_branch
    %14 = sbr.rel (0) target = $region9
  $region8: #{mlp_forward.1} parent=0 // pred_region
    _
  $region9: #{mlp_forward.1} parent=0 // pred_fallthru
    _
  // Predicated region
  $region10: #{mlp_forward.1} parent=0 // pred_check
    _
  $region11: #{mlp_forward.1} parent=0 // pred_check_branch
    %16 = sbr.rel (0) target = $region13
  $region12: #{mlp_forward.1} parent=0 // pred_region
    _
  $region13: #{mlp_forward.1} parent=0 // pred_fallthru
    _
  // Predicated region
  $region14: #{mlp_forward.1} parent=0 // pred_check
    _
  $region15: #{mlp_forward.1} parent=0 // pred_check_branch
    %18 = sbr.rel (0) target = $region17
  $region16: #{mlp_forward.1} parent=0 // pred_region
    _
  $region17: #{mlp_forward.1} parent=0 // pred_fallthru
    _
  // Predicated region
  $region18: #{mlp_forward.1} parent=0 // pred_check
    _
  $region19: #{mlp_forward.1} parent=0 // pred_check_branch
    %20 = sbr.rel (0) target = $region21
  $region20: #{mlp_forward.1} parent=0 // pred_region
    _
  $region21: #{mlp_forward.1} parent=0 // pred_fallthru
    _
  %v21 = vld [vmem:[%s1] sm:$0xff]
  %v22 = vld [vmem:[%s1 + $0x8] sm:$0xff]
  %v23 = vld [vmem:[%s1 + $0x10] sm:$0xff]
  %v24 = vld [vmem:[%s1 + $0x18] sm:$0xff]
  %v25 = vld [vmem:[%s0] sm:$0xff]
  %v26 = vld [vmem:[%s0 + $0x8] sm:$0xff]
  %v27 = vld [vmem:[%s0 + $0x10] sm:$0xff]
  %v28 = vld [vmem:[%s0 + $0x18] sm:$0xff]
  %v29 = vld [vmem:[%s0 + $0x20] sm:$0xff]
  %v30 = vld [vmem:[%s0 + $0x28] sm:$0xff]
  %v31 = vld [vmem:[%s0 + $0x30] sm:$0xff]
  %v32 = vld [vmem:[%s0 + $0x38] sm:$0xff]
  %v33 = vld [vmem:[%s0 + $0x40] sm:$0xff]
  %v34 = vld [vmem:[%s0 + $0x48] sm:$0xff]
  %v35 = vld [vmem:[%s0 + $0x50] sm:$0xff]
  %v36 = vld [vmem:[%s0 + $0x58] sm:$0xff]
  %v37 = vld [vmem:[%s0 + $0x60] sm:$0xff]
  %v38 = vld [vmem:[%s0 + $0x68] sm:$0xff]
  %v39 = vld [vmem:[%s0 + $0x70] sm:$0xff]
  %v40 = vld [vmem:[%s0 + $0x78] sm:$0xff]
  %v41 = vld [vmem:[%s2] sm:$0xff]
  %v42 = vld [vmem:[%s2 + $0x8] sm:$0xff]
  %v43 = vld [vmem:[%s2 + $0x10] sm:$0xff]
  %v44 = vld [vmem:[%s2 + $0x18] sm:$0xff]
  %46 = vset.pattern.permute.xlu0 0
  %47 = vperm.xlu0 %46, %v41
  %v48 = vpop.permute.xlu0 %47
  %51 = vset.pattern.permute.xlu0 0
  %52 = vperm.xlu0 %51, %v42
  %v53 = vpop.permute.xlu0 %52
  %56 = vset.pattern.permute.xlu0 0
  %57 = vperm.xlu0 %56, %v43
  %v58 = vpop.permute.xlu0 %57
  %61 = vset.pattern.permute.xlu0 0
  %62 = vperm.xlu0 %61, %v44
  %v63 = vpop.permute.xlu0 %62
  %vm65 = vcmask 80896
  %v67 = vsel %vm65, %v21, 0
  %v70 = vsel %vm65, %v22, 0
  %v73 = vsel %vm65, %v23, 0
  %v76 = vsel %vm65, %v24, 0
  %v79 = vsel %vm65, %v25, 0
  %v82 = vsel %vm65, %v26, 0
  %v85 = vsel %vm65, %v27, 0
  %v88 = vsel %vm65, %v28, 0
  %v91 = vsel %vm65, %v29, 0
  %v94 = vsel %vm65, %v30, 0
  %v97 = vsel %vm65, %v31, 0
  %v100 = vsel %vm65, %v32, 0
  %v103 = vsel %vm65, %v33, 0
  %v106 = vsel %vm65, %v34, 0
  %v109 = vsel %vm65, %v35, 0
  %v112 = vsel %vm65, %v36, 0
  %v115 = vsel %vm65, %v37, 0
  %v118 = vsel %vm65, %v38, 0
  %v121 = vsel %vm65, %v39, 0
  %v124 = vsel %vm65, %v40, 0
  %126 = vmatprep.subr.mxu0 0.0
  %127 = vmatpush1.xpose.msra.mxu0 %v79
  %128 = vmatprep.subr.mxu0 0.0
  %129 = vmatpush1.xpose.msra.mxu0 %v82
  %130 = vmatprep.subr.mxu0 0.0
  %131 = vmatpush1.xpose.msra.mxu0 %v85
  %132 = vmatprep.subr.mxu0 0.0
  %133 = vmatpush1.xpose.msra.mxu0 %v88
  %134 = vmatprep.subr.mxu0 0.0
  %135 = vmatpush1.xpose.msra.mxu0 %v91
  %136 = vmatprep.subr.mxu0 0.0
  %137 = vmatpush1.xpose.msra.mxu0 %v94
  %138 = vmatprep.subr.mxu0 0.0
  %139 = vmatpush1.xpose.msra.mxu0 %v97
  %140 = vmatprep.subr.mxu0 0.0
  %141 = vmatpush1.xpose.msra.mxu0 %v100
  %142 = vmatprep.subr.mxu0 0.0
  %143 = vmatpush1.xpose.msra.mxu0 %v103
  %144 = vmatprep.subr.mxu0 0.0
  %145 = vmatpush1.xpose.msra.mxu0 %v106
  %146 = vmatprep.subr.mxu0 0.0
  %147 = vmatpush1.xpose.msra.mxu0 %v109
  %148 = vmatprep.subr.mxu0 0.0
  %149 = vmatpush1.xpose.msra.mxu0 %v112
  %150 = vmatprep.subr.mxu0 0.0
  %151 = vmatpush1.xpose.msra.mxu0 %v115
  %152 = vmatprep.subr.mxu0 0.0
  %153 = vmatpush1.xpose.msra.mxu0 %v118
  %154 = vmatprep.subr.mxu0 0.0
  %155 = vmatpush1.xpose.msra.mxu0 %v121
  %156 = vmatprep.subr.mxu0 0.0
  %157 = vmatpush1.xpose.msra.mxu0 %v124
  %158 = vmatprep.subr.mxu0 0.0
  %159 = vmatpush1.xpose.msra.mxu0 0.0
  %160 = vmatprep.subr.mxu0 0.0
  %161 = vmatpush1.xpose.msra.mxu0 0.0
  %162 = vmatprep.subr.mxu0 0.0
  %163 = vmatpush1.xpose.msra.mxu0 0.0
  %164 = vmatprep.subr.mxu0 0.0
  %165 = vmatpush1.xpose.msra.mxu0 0.0
  %166 = vmatprep.subr.mxu0 0.0
  %167 = vmatpush1.xpose.msra.mxu0 0.0
  %168 = vmatprep.subr.mxu0 0.0
  %169 = vmatpush1.xpose.msra.mxu0 0.0
  %170 = vmatprep.subr.mxu0 0.0
  %171 = vmatpush1.xpose.msra.mxu0 0.0
  %172 = vmatprep.subr.mxu0 0.0
  %173 = vmatpush1.xpose.msra.mxu0 0.0
  %174 = vmatprep.subr.mxu0 0.0
  %175 = vmatpush1.xpose.msra.mxu0 0.0
  %176 = vmatprep.subr.mxu0 0.0
  %177 = vmatpush1.xpose.msra.mxu0 0.0
  %178 = vmatprep.subr.mxu0 0.0
  %179 = vmatpush1.xpose.msra.mxu0 0.0
  %180 = vmatprep.subr.mxu0 0.0
  %181 = vmatpush1.xpose.msra.mxu0 0.0
  %182 = vmatprep.subr.mxu0 0.0
  %183 = vmatpush1.xpose.msra.mxu0 0.0
  %184 = vmatprep.subr.mxu0 0.0
  %185 = vmatpush1.xpose.msra.mxu0 0.0
  %186 = vmatprep.subr.mxu0 0.0
  %187 = vmatpush1.xpose.msra.mxu0 0.0
  %188 = vmatprep.subr.mxu0 0.0
  %189 = vmatpush1.xpose.msra.mxu0 0.0
  %190 = vmatprep.mubr.f32.mxu0 0.0
  %191 = vmatmul.mubr.f32.gmra.mrb[0].mxu0 %v67
  %v192 = vpop.f32.mrb[0].mxu0
  %v193 = vadd.f32 %v48, %v192
  %v194 = vpop.f32.mrb[0].mxu0
  %195 = vmatprep.mubr.f32.mxu0 0.0
  %196 = vmatmul.mubr.f32.gmra.mrb[0].mxu0 %v70
  %v197 = vpop.f32.mrb[0].mxu0
  %v198 = vadd.f32 %v53, %v197
  %v199 = vpop.f32.mrb[0].mxu0
  %200 = vmatprep.mubr.f32.mxu0 0.0
  %201 = vmatmul.mubr.f32.gmra.mrb[0].mxu0 %v73
  %v202 = vpop.f32.mrb[0].mxu0
  %v203 = vadd.f32 %v58, %v202
  %v204 = vpop.f32.mrb[0].mxu0
  %205 = vmatprep.mubr.f32.mxu0 0.0
  %206 = vmatmul.mubr.f32.gmra.mrb[0].mxu0 %v76
  %v207 = vpop.f32.mrb[0].mxu0
  %v208 = vadd.f32 %v63, %v207
  %v209 = vpop.f32.mrb[0].mxu0
  %210 = vdwg.mxu0
  %v211 = vmul.f32 %v193, 0.5
  %v212 = vmul.f32 %v198, 0.5
  %v213 = vmul.f32 %v203, 0.5
  %v214 = vmul.f32 %v208, 0.5
  %v215 = vtanh.pop %v211
  %v216 = vtanh.pop %v212
  %v217 = vtanh.pop %v213
  %v218 = vtanh.pop %v214
  %v219 = vmul.f32 %v215, 0.5
  %v220 = vmul.f32 %v216, 0.5
  %v221 = vmul.f32 %v217, 0.5
  %v222 = vmul.f32 %v218, 0.5
  %v223 = vadd.f32 %v219, 0.5
  %v224 = vadd.f32 %v220, 0.5
  %v225 = vadd.f32 %v221, 0.5
  %v226 = vadd.f32 %v222, 0.5
  %v227 = vld [vmem:[%s3] sm:$0xff]
  %v228 = vld [vmem:[%s3 + $0x8] sm:$0xff]
  %v229 = vld [vmem:[%s3 + $0x10] sm:$0xff]
  %v230 = vld [vmem:[%s3 + $0x18] sm:$0xff]
  %232 = vset.pattern.permute.xlu0 0
  %233 = vperm.xlu0 %232, %v227
  %v234 = vpop.permute.xlu0 %233
  %237 = vset.pattern.permute.xlu0 0
  %238 = vperm.xlu0 %237, %v228
  %v239 = vpop.permute.xlu0 %238
  %242 = vset.pattern.permute.xlu0 0
  %243 = vperm.xlu0 %242, %v229
  %v244 = vpop.permute.xlu0 %243
  %247 = vset.pattern.permute.xlu0 0
  %248 = vperm.xlu0 %247, %v230
  %v249 = vpop.permute.xlu0 %248
  %v251 = vmul.f32 %v223, %v234
  %v252 = vmul.f32 %v224, %v239
  %v253 = vmul.f32 %v225, %v244
  %v254 = vmul.f32 %v226, %v249
  %v255 = vadd.f32 %v251, %v252
  %v256 = vadd.f32 %v255, %v253
  %v257 = vadd.f32 %v256, %v254
  %v258 = vrot.slane %v257, 4
  %v259 = vadd.f32 %v257, %v258
  %v260 = vrot.slane %v259, 2
  %v261 = vadd.f32 %v259, %v260
  %v262 = vrot.slane %v261, 1
  %v263 = vadd.f32 %v261, %v262
  %s264 = sld [smem:[#allocation2]]
  %v265 = vstv %s264
  %v266 = vadd.f32 %v263, %v265
  %267 = vst [vmem:[%s5] sm:$0x1] %v266
  // Predicated region
  $region22: #{mlp_forward.1} parent=0 // pred_check
    _
  $region23: #{mlp_forward.1} parent=0 // pred_check_branch
    %269 = sbr.rel (0) target = $region25
  $region24: #{mlp_forward.1} parent=0 // pred_region
    _
  $region25: #{mlp_forward.1} parent=0 // pred_fallthru
    _
  // Predicated region
  $region26: #{mlp_forward.1} parent=0 // pred_check
    _
  $region27: #{mlp_forward.1} parent=0 // pred_check_branch
    %271 = sbr.rel (0) target = $region29
  $region28: #{mlp_forward.1} parent=0 // pred_region
    _
  $region29: #{mlp_forward.1} parent=0 // pred_fallthru
    _

</llo_original>
